<compile_context>
chip_gen: v7x
topology: tpu7x:2x2x1
jax: 0.10.0
libtpu: 0.0.40
codegen_flags: <defaults>
</compile_context>

<pallas_src>
import jax
import jax.numpy as jnp
from jax.experimental import pallas as pl
from jax.experimental.pallas import tpu as pltpu


_LANE = 128
_MAX_LANE_WIDTH = 8192        # keep rows reasonably wide -> chunky DMA descriptors
_CHUNK_BYTES = 4 << 20        # ~4 MiB per DMA chunk; no VMEM is consumed, so the
                              # same setting is safe on v5e / v6e / v7x.


def _pick_lane_width(total):
    """Largest divisor of `total` <= _MAX_LANE_WIDTH, preferring multiples of
    128.  Always succeeds (worst case 1), so no padding is ever needed."""
    hi = min(total, _MAX_LANE_WIDTH)
    lane_hi = hi - hi % _LANE
    for lane in range(lane_hi, 0, -_LANE):        # lane-aligned widths first
        if total % lane == 0:
            return lane
    for lane in range(hi, 0, -1):                 # any divisor (odd/prime totals)
        if total % lane == 0:
            return lane
    return 1


def _make_hbm_copy_kernel(rows, nf, tail_rows):
    """Chunked HBM->HBM DMA copy of an (M, L) slab living in HBM.

    `nf` full chunks of `rows` rows each, plus one `tail_rows`-row chunk.
    All chunk sizes are static; only row offsets are dynamic.  Two DMA
    semaphores let the next chunk's DMA be issued before waiting on the
    previous one, keeping up to two copies in flight."""

    def kernel(x_hbm, o_hbm, sem):
        def start(row0, nrows, slot):
            pltpu.make_async_copy(
                x_hbm.at[pl.ds(row0, nrows)],
                o_hbm.at[pl.ds(row0, nrows)],
                sem.at[slot],
            ).start()

        def wait_full(slot):
            # .wait() only needs the window size + semaphore; use chunk 0's
            # window as a same-shaped template (standard paged-attention trick).
            pltpu.make_async_copy(
                x_hbm.at[pl.ds(0, rows)],
                o_hbm.at[pl.ds(0, rows)],
                sem.at[slot],
            ).wait()

        if nf > 0:
            start(0, rows, 0)
            if nf > 1:
                @pl.loop(0, nf - 1)
                def _(i):
                    start((i + 1) * rows, rows, (i + 1) & 1)   # prefetch next chunk
                    wait_full(i & 1)                           # drain current chunk
            wait_full((nf - 1) & 1)                            # drain last full chunk

        if tail_rows > 0:                                      # static-size tail chunk
            cp = pltpu.make_async_copy(
                x_hbm.at[pl.ds(nf * rows, tail_rows)],
                o_hbm.at[pl.ds(nf * rows, tail_rows)],
                sem.at[0],
            )
            cp.start()
            cp.wait()

    return kernel


def _hbm_copy_2d(x2, chunk_bytes=_CHUNK_BYTES):
    """Materialized identity copy of an (M, L) slab via direct HBM->HBM DMA."""
    m, lane = x2.shape
    itemsize = jnp.dtype(x2.dtype).itemsize
    rows = max(1, min(m, chunk_bytes // max(1, lane * itemsize)))
    nf = m // rows
    tail_rows = m - nf * rows

    return pl.pallas_call(
        _make_hbm_copy_kernel(rows, nf, tail_rows),
        out_shape=jax.ShapeDtypeStruct((m, lane), x2.dtype),
        in_specs=[pl.BlockSpec(memory_space=pl.ANY)],     # raw HBM ref, no auto-DMA
        out_specs=pl.BlockSpec(memory_space=pl.ANY),      # written directly via DMA
        scratch_shapes=[pltpu.SemaphoreType.DMA((2,))],
    )(x2)


def flatten_pallas(x, index=1, materialize=False, chunk_bytes=_CHUNK_BYTES):
    """Equivalent of torch.Tensor.flatten(start_dim=index).

    Default path is the zero-copy metadata reshape (recommended: zero HBM
    traffic, no kernel launch).  `materialize=True` forces a fresh buffer via
    a chunked HBM->HBM DMA copy kernel."""
    ndim = x.ndim
    if index < 0:
        index += ndim
    lead = x.shape[:index]
    flat = 1
    for d in x.shape[index:]:
        flat *= d
    out_shape = lead + (flat,)

    if not materialize or x.size == 0:
        return x.reshape(out_shape)

    total = x.size
    lane = _pick_lane_width(total)
    y2 = _hbm_copy_2d(x.reshape(total // lane, lane), chunk_bytes=chunk_bytes)
    return y2.reshape(out_shape)


if __name__ == "__main__":
    key = jax.random.PRNGKey(0)
    # Small NCHW input consistent with how Flatten(1) is used in unet_stylegan2.
    x = jax.random.normal(key, (2, 4, 16, 16), dtype=jnp.float32)
    ref = x.reshape(x.shape[0], -1)

    # Default (production) path: metadata-only reshape.
    out_default = jax.block_until_ready(flatten_pallas(x, index=1))
    assert out_default.shape == (2, 4 * 16 * 16), out_default.shape
    assert bool(jnp.array_equal(out_default, ref)), "mismatch (default reshape path)"

    # Materialized path: single-chunk HBM->HBM DMA copy kernel.
    out = jax.block_until_ready(flatten_pallas(x, index=1, materialize=True))
    assert out.shape == (2, 4 * 16 * 16) and out.dtype == x.dtype
    assert bool(jnp.array_equal(out, ref)), "mismatch vs reference flatten (index=1)"

    # index=0 (flatten everything) through the same kernel.
    out0 = jax.block_until_ready(flatten_pallas(x, index=0, materialize=True))
    assert out0.shape == (2 * 4 * 16 * 16,)
    assert bool(jnp.array_equal(out0, x.reshape(-1))), "mismatch (index=0)"

    # Odd element count (no multiple-of-128 divisor) -> exact divisor lane width,
    # no padding, single DMA.
    x_odd = jax.random.normal(jax.random.PRNGKey(1), (2, 3, 5, 7), dtype=jnp.float32)
    out_odd = jax.block_until_ready(flatten_pallas(x_odd, index=1, materialize=True))
    assert bool(jnp.array_equal(out_odd, x_odd.reshape(2, -1))), "mismatch (odd total)"

    # Multi-chunk + tail path: (5, 8192) f32 with a tiny chunk budget gives
    # rows=2 -> 2 full chunks (exercises the double-buffered pl.loop) + 1 tail row.
    x_big = jax.random.normal(jax.random.PRNGKey(2), (5, 8192), dtype=jnp.float32)
    out_big = jax.block_until_ready(
        flatten_pallas(x_big, index=0, materialize=True, chunk_bytes=2 * 8192 * 4))
    assert bool(jnp.array_equal(out_big, x_big.reshape(-1))), "mismatch (chunked path)"

    # bf16 sanity check (DMA copy is dtype-agnostic).
    x_bf16 = jax.random.normal(jax.random.PRNGKey(3), (2, 4, 8, 8)).astype(jnp.bfloat16)
    out_bf16 = jax.block_until_ready(flatten_pallas(x_bf16, index=1, materialize=True))
    assert out_bf16.dtype == jnp.bfloat16
    assert bool(jnp.array_equal(out_bf16, x_bf16.reshape(2, -1))), "mismatch (bf16)"

    print("KERNEL_OK")
</pallas_src>

<mosaic_0001>
module attributes {stable_mosaic.version = 11 : i64} {
  func.func @kernel(%arg0: memref<1x2048xf32, #tpu.memory_space<any>>, %arg1: memref<1x2048xf32, #tpu.memory_space<any>>, %arg2: memref<2x!tpu.dma_semaphore, #tpu.memory_space<semaphore_mem>>) attributes {dimension_semantics = [], scalar_prefetch = 0 : i64, scratch_operands = 1 : i64, tpu.core_type = #tpu.core_type<tc>} {
    %c0_i32 = arith.constant 0 : i32
    %c0_i32_0 = arith.constant 0 : i32
    %c0_i32_1 = arith.constant 0 : i32
    %0 = tpu.memref_slice %arg0[%c0_i32_0, %c0_i32_1] : memref<1x2048xf32, #tpu.memory_space<any>> -> memref<1x2048xf32, #tpu.memory_space<any>>
    %c0_i32_2 = arith.constant 0 : i32
    %c0_i32_3 = arith.constant 0 : i32
    %1 = tpu.memref_slice %arg1[%c0_i32_2, %c0_i32_3] : memref<1x2048xf32, #tpu.memory_space<any>> -> memref<1x2048xf32, #tpu.memory_space<any>>
    %2 = tpu.memref_slice %arg2[%c0_i32] : memref<2x!tpu.dma_semaphore, #tpu.memory_space<semaphore_mem>> -> memref<1x!tpu.dma_semaphore, #tpu.memory_space<semaphore_mem>>
    %3 = tpu.memref_squeeze %2 : memref<1x!tpu.dma_semaphore, #tpu.memory_space<semaphore_mem>> -> memref<!tpu.dma_semaphore, #tpu.memory_space<semaphore_mem>>
    tpu.enqueue_dma source(%0 : memref<1x2048xf32, #tpu.memory_space<any>>) target(%1 : memref<1x2048xf32, #tpu.memory_space<any>>) target_semaphore(%3 : memref<!tpu.dma_semaphore, #tpu.memory_space<semaphore_mem>>)
    %c0_i32_4 = arith.constant 0 : i32
    %c0_i32_5 = arith.constant 0 : i32
    %c0_i32_6 = arith.constant 0 : i32
    %4 = tpu.memref_slice %arg0[%c0_i32_5, %c0_i32_6] : memref<1x2048xf32, #tpu.memory_space<any>> -> memref<1x2048xf32, #tpu.memory_space<any>>
    %c0_i32_7 = arith.constant 0 : i32
    %c0_i32_8 = arith.constant 0 : i32
    %5 = tpu.memref_slice %arg1[%c0_i32_7, %c0_i32_8] : memref<1x2048xf32, #tpu.memory_space<any>> -> memref<1x2048xf32, #tpu.memory_space<any>>
    %6 = tpu.memref_slice %arg2[%c0_i32_4] : memref<2x!tpu.dma_semaphore, #tpu.memory_space<semaphore_mem>> -> memref<1x!tpu.dma_semaphore, #tpu.memory_space<semaphore_mem>>
    %7 = tpu.memref_squeeze %6 : memref<1x!tpu.dma_semaphore, #tpu.memory_space<semaphore_mem>> -> memref<!tpu.dma_semaphore, #tpu.memory_space<semaphore_mem>>
    tpu.wait_dma2 semaphore(%7 : memref<!tpu.dma_semaphore, #tpu.memory_space<semaphore_mem>>) src(%4 : memref<1x2048xf32, #tpu.memory_space<any>>) dst(%5 : memref<1x2048xf32, #tpu.memory_space<any>>)
    return
  }
}

</mosaic_0001>

<llo_original>
// kernel: tpu_custom_call.1
$region0: #{tpu_custom_call.1}
  #allocation0 [shape = 'u32[]', space=smem, size = 0x4, offset = 0x4, fixed_abs, tag = 'smem constant byte address 0x4 - core index']
  #allocation1 [shape = 'u32[144,128]{1,0:T(1,128)}', space=vmem, size = 0x12000, scoped, tag = 'internal scratch']
  #allocation2 [shape = 's32[2]{0}', space=sflag, size = 0x8, scoped, tag = 'scratch operand']
  #allocation3 [shape = 's32[]', space=sflag, size = 0x4, offset = 0, fixed_abs, tag = 'sflag constant byte address 0x0 - dummy sync flag']
  #allocation4 [shape = 'u32[0]{0}', space=smem, size = 0, offset = 0, fixed_abs, tag = 'smem constant byte address 0x0 - null']
  %s0 = inlined_call_operand.hbm [shape: f32[1,2048], index: 0, kind: input, shape index: {}]
  %s1 = inlined_call_operand.hbm [shape: f32[1,2048], index: 1, kind: output, shape index: {}]
  %s2 = sld [smem:[#allocation0]]
  $region2: #{tpu_custom_call.1} parent=0
    _
  %s4 = ssub.s32 1, %s2
  %s5 = scalar_select 0, %s4, %s2
  %s7 = sshll.u32 1, 14
  %s8 = sxor.u32 4294967295, %s7
  %s11 = sshll.u32 3, 24
  %s12 = sxor.u32 4294967295, %s11
  %s13 = sand.u32 0, %s12
  %s15 = sor.u32 %s13, 0
  %18 = dma.general %s0, 256, %s1, [#allocation2], [#allocation3], [#allocation4], %s15, 0
  %s19 = smul.u32 1, 16
  %s20 = sshll.u32 %s19, 4
  %21 = dma.done [#allocation2], %s20
  %22 = vsyncmov [#allocation2]
  %s23 = vpop.sfrf %22
  %p24 = scmp.eq.s32.totalorder %s23, 0
  %p25 = pneg %p24
  %27 = shalt.err (%p25)
  %s28 = scalar_lea.sflag [#allocation2], 1
  %29 = vsyncmov %s28
  %s30 = vpop.sfrf %29
  %p31 = scmp.eq.s32.totalorder %s30, 0
  %p32 = pneg %p31
  %34 = shalt.err (%p32)

</llo_original>
